<compile_context>
chip_gen: v7x
topology: tpu7x:2x2x1
jax: 0.10.0
libtpu: 0.0.40
codegen_flags: <defaults>
</compile_context>

<pallas_src>
import functools

import jax
import jax.numpy as jnp
from jax.experimental import pallas as pl
from jax.experimental.pallas import tpu as pltpu


_LANE_CANDIDATES = (4096, 2048, 1024, 512, 256, 128)
_TARGET_BLOCK_ELEMS = 512 * 1024        # ~2 MiB of f32 per input per buffer


def _partial_sums_kernel(pm_ref, gm_ref, pg_ref, s_ref, *, tm, lanes, n_valid,
                         needs_mask):
    x = pm_ref[...].astype(jnp.float32)           # (tm, lanes) logits
    g = gm_ref[...].astype(jnp.float32)           # (tm, lanes) gt mask

    # sigmoid(x) == 0.5 * tanh(0.5 * x) + 0.5  (single EUP transcendental).
    p = 0.5 * jnp.tanh(0.5 * x) + 0.5

    if needs_mask:
        # Only needed for ragged shapes: zero out padded / out-of-bounds
        # elements so they contribute nothing to either running sum.
        i = pl.program_id(0)
        r = jax.lax.broadcasted_iota(jnp.int32, (tm, lanes), 0)
        c = jax.lax.broadcasted_iota(jnp.int32, (tm, lanes), 1)
        keep = (i * tm + r) * lanes + c < n_valid
        p = jnp.where(keep, p, 0.0)
        g = jnp.where(keep, g, 0.0)

    pg = jnp.sum(p * g)        # block partial of the intersection
    s = jnp.sum(p + g)         # block partial of sum(p) + sum(gt) (fused)

    pg_ref[...] = jnp.full((1, 8, 128), pg, jnp.float32)
    s_ref[...] = jnp.full((1, 8, 128), s, jnp.float32)


@jax.jit
def mask_iou_loss(pred_mask, ground_truth_mask, pred_iou):
    """pred_mask, ground_truth_mask: [B,1,H,W]; pred_iou: [B,1] -> scalar."""
    assert pred_mask.shape == ground_truth_mask.shape, (
        "pred_mask and ground_truth_mask should have the same shape.")

    n_valid = 1
    for d in pred_mask.shape:
        n_valid *= int(d)

    pm = pred_mask.reshape(-1)
    gm = ground_truth_mask.reshape(-1)

    # Lane width: largest candidate dividing the element count makes the
    # [N] -> [M, L] reshape a pure metadata change (no extra HBM pass).
    lanes = next((c for c in _LANE_CANDIDATES if n_valid % c == 0), None)
    if lanes is None:                       # rare ragged fallback: one zero-pad
        lanes = 128
        pad = (-n_valid) % lanes
        pm = jnp.pad(pm, (0, pad))
        gm = jnp.pad(gm, (0, pad))
    m_rows = pm.shape[0] // lanes
    pm = pm.reshape(m_rows, lanes)
    gm = gm.reshape(m_rows, lanes)

    # Row-block size: multiple of 8 (or the full row extent), ~2 MiB f32.
    tm_cap = max(8, (_TARGET_BLOCK_ELEMS // lanes) // 8 * 8)
    tm = m_rows if m_rows <= tm_cap else tm_cap
    n_blocks = (m_rows + tm - 1) // tm
    needs_mask = (n_blocks * tm * lanes) != n_valid

    kernel = functools.partial(
        _partial_sums_kernel, tm=tm, lanes=lanes, n_valid=n_valid,
        needs_mask=needs_mask)

    out_pg, out_s = pl.pallas_call(
        kernel,
        out_shape=(
            jax.ShapeDtypeStruct((n_blocks, 8, 128), jnp.float32),
            jax.ShapeDtypeStruct((n_blocks, 8, 128), jnp.float32),
        ),
        grid_spec=pltpu.PrefetchScalarGridSpec(
            num_scalar_prefetch=0,
            grid=(n_blocks,),
            in_specs=[
                pl.BlockSpec((tm, lanes), lambda i: (i, 0)),
                pl.BlockSpec((tm, lanes), lambda i: (i, 0)),
            ],
            out_specs=[
                pl.BlockSpec((1, 8, 128), lambda i: (i, 0, 0)),
                pl.BlockSpec((1, 8, 128), lambda i: (i, 0, 0)),
            ],
        ),
        compiler_params=pltpu.CompilerParams(
            dimension_semantics=("parallel",),
        ),
    )(pm, gm)

    # Trivial scalar epilogue: combine per-block partials with pred_iou.
    inter = jnp.sum(out_pg[:, 0, 0])
    union = jnp.sum(out_s[:, 0, 0]) - inter
    iou = (inter + 1e-7) / (union + 1e-7)
    diff = iou - pred_iou.astype(jnp.float32)
    return jnp.mean(diff * diff)


def _reference(pred_mask, ground_truth_mask, pred_iou):
    p = jax.nn.sigmoid(pred_mask.astype(jnp.float32))
    g = ground_truth_mask.astype(jnp.float32)
    inter = jnp.sum(p * g)
    union = jnp.sum(p) + jnp.sum(g) - inter
    iou = (inter + 1e-7) / (union + 1e-7)
    return jnp.mean((iou - pred_iou.astype(jnp.float32)) ** 2)


if __name__ == "__main__":
    key = jax.random.PRNGKey(0)
    k1, k2, k3, k4, k5, k6 = jax.random.split(key, 6)

    # Test 1: canonical layout, nicely divisible shapes (no masking path).
    B, C, H, W = 2, 1, 16, 16
    pred_mask = jax.random.normal(k1, (B, C, H, W), dtype=jnp.float32)
    gt_mask = (jax.random.uniform(k2, (B, C, H, W)) > 0.5).astype(jnp.float32)
    pred_iou = jax.random.uniform(k3, (B, 1), dtype=jnp.float32)

    loss = jax.block_until_ready(mask_iou_loss(pred_mask, gt_mask, pred_iou))
    ref = jax.block_until_ready(_reference(pred_mask, gt_mask, pred_iou))
    assert jnp.allclose(loss, ref, rtol=1e-4, atol=1e-6), (loss, ref)

    # Test 2: ragged spatial size (exercises the in-kernel tail masking).
    B2, H2, W2 = 3, 17, 13
    pred_mask2 = jax.random.normal(k4, (B2, 1, H2, W2), dtype=jnp.float32)
    gt_mask2 = (jax.random.uniform(k5, (B2, 1, H2, W2)) > 0.5).astype(jnp.float32)
    pred_iou2 = jax.random.uniform(k6, (B2, 1), dtype=jnp.float32)

    loss2 = jax.block_until_ready(mask_iou_loss(pred_mask2, gt_mask2, pred_iou2))
    ref2 = jax.block_until_ready(_reference(pred_mask2, gt_mask2, pred_iou2))
    assert jnp.allclose(loss2, ref2, rtol=1e-4, atol=1e-6), (loss2, ref2)

    print("KERNEL_OK")
</pallas_src>

<mosaic_0001>
module attributes {stable_mosaic.version = 11 : i64} {
  func.func @_partial_sums_kernel(%arg0: i32, %arg1: memref<1x512xf32, #tpu.memory_space<vmem>>, %arg2: memref<1x512xf32, #tpu.memory_space<vmem>>, %arg3: memref<1x8x128xf32, #tpu.memory_space<vmem>>, %arg4: memref<1x8x128xf32, #tpu.memory_space<vmem>>) attributes {dimension_semantics = [#tpu.dimension_semantics<parallel>], iteration_bounds = array<i64: 1>, scalar_prefetch = 0 : i64, scratch_operands = 0 : i64, tpu.core_type = #tpu.core_type<tc>, window_params = [{transform_indices = @transform_0, window_bounds = array<i64: 1, 512>}, {transform_indices = @transform_1, window_bounds = array<i64: 1, 512>}, {transform_indices = @transform_2, window_bounds = array<i64: 1, 8, 128>}, {transform_indices = @transform_3, window_bounds = array<i64: 1, 8, 128>}]} {
    %c0 = arith.constant 0 : index
    %c0_0 = arith.constant 0 : index
    %0 = vector.load %arg1[%c0, %c0_0] : memref<1x512xf32, #tpu.memory_space<vmem>>, vector<1x512xf32>
    %c0_1 = arith.constant 0 : index
    %c0_2 = arith.constant 0 : index
    %1 = vector.load %arg2[%c0_1, %c0_2] : memref<1x512xf32, #tpu.memory_space<vmem>>, vector<1x512xf32>
    %cst = arith.constant 5.000000e-01 : f32
    %2 = vector.broadcast %cst : f32 to vector<1x512xf32>
    %3 = arith.mulf %2, %0 : vector<1x512xf32>
    %4 = math.tanh %3 : vector<1x512xf32>
    %cst_3 = arith.constant 5.000000e-01 : f32
    %5 = vector.broadcast %cst_3 : f32 to vector<1x512xf32>
    %6 = arith.mulf %5, %4 : vector<1x512xf32>
    %cst_4 = arith.constant 5.000000e-01 : f32
    %7 = vector.broadcast %cst_4 : f32 to vector<1x512xf32>
    %8 = arith.addf %6, %7 : vector<1x512xf32>
    %9 = arith.mulf %8, %1 : vector<1x512xf32>
    %10 = vector.shape_cast %9 : vector<1x512xf32> to vector<1x1x512xf32>
    %cst_5 = arith.constant dense<0.000000e+00> : vector<1xf32>
    %11 = vector.multi_reduction <add>, %10, %cst_5 [1, 2] : vector<1x1x512xf32> to vector<1xf32>
    %12 = vector.shape_cast %11 : vector<1xf32> to vector<1x1x1xf32>
    %13 = vector.extract %12[0, 0, 0] : f32 from vector<1x1x1xf32>
    %14 = arith.addf %8, %1 : vector<1x512xf32>
    %15 = vector.shape_cast %14 : vector<1x512xf32> to vector<1x1x512xf32>
    %cst_6 = arith.constant dense<0.000000e+00> : vector<1xf32>
    %16 = vector.multi_reduction <add>, %15, %cst_6 [1, 2] : vector<1x1x512xf32> to vector<1xf32>
    %17 = vector.shape_cast %16 : vector<1xf32> to vector<1x1x1xf32>
    %18 = vector.extract %17[0, 0, 0] : f32 from vector<1x1x1xf32>
    %19 = vector.broadcast %13 : f32 to vector<1x8x128xf32>
    %c0_7 = arith.constant 0 : index
    %c0_8 = arith.constant 0 : index
    %c0_9 = arith.constant 0 : index
    %20 = vector.load %arg3[%c0_7, %c0_8, %c0_9] : memref<1x8x128xf32, #tpu.memory_space<vmem>>, vector<1x8x128xf32>
    tpu.vector_store %arg3[%c0_7, %c0_8, %c0_9], %19 {strides = array<i32>} : memref<1x8x128xf32, #tpu.memory_space<vmem>>, vector<1x8x128xf32>,
    %21 = vector.broadcast %18 : f32 to vector<1x8x128xf32>
    %c0_10 = arith.constant 0 : index
    %c0_11 = arith.constant 0 : index
    %c0_12 = arith.constant 0 : index
    %22 = vector.load %arg4[%c0_10, %c0_11, %c0_12] : memref<1x8x128xf32, #tpu.memory_space<vmem>>, vector<1x8x128xf32>
    tpu.vector_store %arg4[%c0_10, %c0_11, %c0_12], %21 {strides = array<i32>} : memref<1x8x128xf32, #tpu.memory_space<vmem>>, vector<1x8x128xf32>,
    return
  }
  func.func @transform_0(%arg0: i32) -> (i32, i32) {
    %c0_i32 = arith.constant 0 : i32
    %c0_i32_0 = arith.constant 0 : i32
    return %arg0, %c0_i32 : i32, i32
  }
  func.func @transform_1(%arg0: i32) -> (i32, i32) {
    %c0_i32 = arith.constant 0 : i32
    %c0_i32_0 = arith.constant 0 : i32
    return %arg0, %c0_i32 : i32, i32
  }
  func.func @transform_2(%arg0: i32) -> (i32, i32, i32) {
    %c0_i32 = arith.constant 0 : i32
    %c0_i32_0 = arith.constant 0 : i32
    %c0_i32_1 = arith.constant 0 : i32
    return %arg0, %c0_i32, %c0_i32_0 : i32, i32, i32
  }
  func.func @transform_3(%arg0: i32) -> (i32, i32, i32) {
    %c0_i32 = arith.constant 0 : i32
    %c0_i32_0 = arith.constant 0 : i32
    %c0_i32_1 = arith.constant 0 : i32
    return %arg0, %c0_i32, %c0_i32_0 : i32, i32, i32
  }
}

</mosaic_0001>

<llo_original>
// kernel: mask_iou_loss.1
$region0: #{mask_iou_loss.1}
  #allocation0 [shape = 'u32[]', space=smem, size = 0x4, offset = 0x4, fixed_abs, tag = 'smem constant byte address 0x4 - core index']
  #allocation1 [shape = 'u32[144,128]{1,0:T(1,128)}', space=vmem, size = 0x12000, scoped, tag = 'internal scratch']
  %s0 = inlined_call_operand.vmem [shape: f32[1,512], index: 0, kind: input, shape index: {}]
  %s1 = inlined_call_operand.vmem [shape: f32[1,512], index: 1, kind: input, shape index: {}]
  %s2 = inlined_call_operand.vmem [shape: f32[1,8,128], index: 2, kind: output, shape index: {0}]
  %s3 = inlined_call_operand.vmem [shape: f32[1,8,128], index: 3, kind: output, shape index: {1}]
  %4 = xla_tuple %s2, %s3
  %s5 = sld [smem:[#allocation0]]
  $region26: #{mask_iou_loss.1} parent=0
    _
  %s7 = ssub.s32 1, %s5
  %s8 = scalar_select 0, %s7, %s5
  // Predicated region
  $region2: #{mask_iou_loss.1} parent=0 // pred_check
    _
  $region3: #{mask_iou_loss.1} parent=0 // pred_check_branch
    %10 = sbr.rel (0) target = $region5
  $region4: #{mask_iou_loss.1} parent=0 // pred_region
    _
  $region5: #{mask_iou_loss.1} parent=0 // pred_fallthru
    _
  // Predicated region
  $region6: #{mask_iou_loss.1} parent=0 // pred_check
    _
  $region7: #{mask_iou_loss.1} parent=0 // pred_check_branch
    %12 = sbr.rel (0) target = $region9
  $region8: #{mask_iou_loss.1} parent=0 // pred_region
    _
  $region9: #{mask_iou_loss.1} parent=0 // pred_fallthru
    _
  %v13 = vld [vmem:[%s0] sm:$0xf]
  %v14 = vld [vmem:[%s1] sm:$0xf]
  %v15 = vmul.f32 %v13, 0.5
  %v16 = vtanh.pop %v15
  %v17 = vmul.f32 %v16, 0.5
  %v18 = vadd.f32 %v17, 0.5
  %v19 = vmul.f32 %v18, %v14
  %v21 = vlaneseq
  %v22 = vshrl.u32 %v21, 7
  %v23 = vsub.s32 0, %v22
  %v24 = vrot.slane %v19, %v23
  %v25 = vlaneseq
  %v26 = vshrl.u32 %v25, 7
  %v27 = vsub.s32 1, %v26
  %v28 = vrot.slane %v19, %v27
  %v29 = vlaneseq
  %v30 = vshrl.u32 %v29, 7
  %v31 = vsub.s32 2, %v30
  %v32 = vrot.slane %v19, %v31
  %v33 = vlaneseq
  %v34 = vshrl.u32 %v33, 7
  %v35 = vsub.s32 3, %v34
  %v36 = vrot.slane %v19, %v35
  %vm41 = vcmask 1040384
  %v42 = vsel %vm41, %v24, 0.0
  %v43 = vsel %vm41, %v28, 0.0
  %v44 = vadd.f32 %v42, %v43
  %v45 = vsel %vm41, %v32, 0.0
  %v46 = vadd.f32 %v44, %v45
  %v47 = vsel %vm41, %v36, 0.0
  %v48 = vadd.f32 %v46, %v47
  %49 = vadd.xlane.f32.xlu0 %v48
  %v50 = vpop.xlane.xlu0 %49
  %v51 = vrot.slane %v50, 4
  %v52 = vadd.f32 %v50, %v51
  %v53 = vrot.slane %v52, 2
  %v54 = vadd.f32 %v52, %v53
  %v55 = vrot.slane %v54, 1
  %v56 = vadd.f32 %v54, %v55
  %s57 = vtos %v56
  %v58 = vadd.f32 %v18, %v14
  %v60 = vlaneseq
  %v61 = vshrl.u32 %v60, 7
  %v62 = vsub.s32 0, %v61
  %v63 = vrot.slane %v58, %v62
  %v64 = vlaneseq
  %v65 = vshrl.u32 %v64, 7
  %v66 = vsub.s32 1, %v65
  %v67 = vrot.slane %v58, %v66
  %v68 = vlaneseq
  %v69 = vshrl.u32 %v68, 7
  %v70 = vsub.s32 2, %v69
  %v71 = vrot.slane %v58, %v70
  %v72 = vlaneseq
  %v73 = vshrl.u32 %v72, 7
  %v74 = vsub.s32 3, %v73
  %v75 = vrot.slane %v58, %v74
  %v80 = vsel %vm41, %v63, 0.0
  %v81 = vsel %vm41, %v67, 0.0
  %v82 = vadd.f32 %v80, %v81
  %v83 = vsel %vm41, %v71, 0.0
  %v84 = vadd.f32 %v82, %v83
  %v85 = vsel %vm41, %v75, 0.0
  %v86 = vadd.f32 %v84, %v85
  %87 = vadd.xlane.f32.xlu0 %v86
  %v88 = vpop.xlane.xlu0 %87
  %v89 = vrot.slane %v88, 4
  %v90 = vadd.f32 %v88, %v89
  %v91 = vrot.slane %v90, 2
  %v92 = vadd.f32 %v90, %v91
  %v93 = vrot.slane %v92, 1
  %v94 = vadd.f32 %v92, %v93
  %s95 = vtos %v94
  %v96 = vstv %s57
  %97 = vst [vmem:[%s2] sm:$0xff] %v96
  %v98 = vstv %s95
  %99 = vst [vmem:[%s3] sm:$0xff] %v98
  // Predicated region
  $region10: #{mask_iou_loss.1} parent=0 // pred_check
    _
  $region11: #{mask_iou_loss.1} parent=0 // pred_check_branch
    %101 = sbr.rel (0) target = $region13
  $region12: #{mask_iou_loss.1} parent=0 // pred_region
    _
  $region13: #{mask_iou_loss.1} parent=0 // pred_fallthru
    _
  // Predicated region
  $region14: #{mask_iou_loss.1} parent=0 // pred_check
    _
  $region15: #{mask_iou_loss.1} parent=0 // pred_check_branch
    %103 = sbr.rel (0) target = $region17
  $region16: #{mask_iou_loss.1} parent=0 // pred_region
    _
  $region17: #{mask_iou_loss.1} parent=0 // pred_fallthru
    _
  // Predicated region
  $region18: #{mask_iou_loss.1} parent=0 // pred_check
    _
  $region19: #{mask_iou_loss.1} parent=0 // pred_check_branch
    %105 = sbr.rel (0) target = $region21
  $region20: #{mask_iou_loss.1} parent=0 // pred_region
    _
  $region21: #{mask_iou_loss.1} parent=0 // pred_fallthru
    _
  // Predicated region
  $region22: #{mask_iou_loss.1} parent=0 // pred_check
    _
  $region23: #{mask_iou_loss.1} parent=0 // pred_check_branch
    %107 = sbr.rel (0) target = $region25
  $region24: #{mask_iou_loss.1} parent=0 // pred_region
    _
  $region25: #{mask_iou_loss.1} parent=0 // pred_fallthru
    _

</llo_original>
